<compile_context>
chip_gen: v7x
topology: tpu7x:2x2x1
jax: 0.10.0
libtpu: 0.0.40
codegen_flags: <defaults>
</compile_context>

<pallas_src>
import functools

import jax
import jax.numpy as jnp
from jax.experimental import pallas as pl
from jax.experimental.pallas import tpu as pltpu


def _round_up(x, m):
    return ((x + m - 1) // m) * m


def _default_act_dtype():
    """bf16 tanh on v6e/v7x (bf16 EUP), f32 on older chips (v5e has no bf16 EUP)."""
    try:
        kind = jax.devices()[0].device_kind.lower()
    except Exception:  # pragma: no cover
        return jnp.float32
    if any(v in kind for v in ("v2", "v3", "v4", "v5")):
        return jnp.float32
    return jnp.bfloat16


# ----------------------------------------------------------------------------
# Pallas kernel: fused 2-layer MLP on a batch tile.
#   x_ref  : (TB, dim_x)    input dtype (f32)  -- straight from HBM, no repack
#   u_ref  : (TB, dim_u)    input dtype (f32)
#   w1x_ref: (dim_x, H_pad) bf16   (resident)
#   w1u_ref: (dim_u, H_pad) bf16   (resident)
#   b1_ref : (1, H_pad)     f32    (resident)
#   w2_ref : (H_pad, N_pad) bf16   (resident)
#   b2_ref : (1, N_pad)     f32    (resident)
#   o_ref  : (TB, N_pad)    out dtype
# ----------------------------------------------------------------------------
def _node_mlp_kernel(x_ref, u_ref, w1x_ref, w1u_ref, b1_ref, w2_ref, b2_ref,
                     o_ref, *, act_dtype):
    # First layer: two small-K MXU dots (f32 accumulate) + one VPU bias add.
    # The bf16 casts of the activation tiles are VPU work hidden under the DMA.
    h = jnp.dot(x_ref[...].astype(w1x_ref.dtype), w1x_ref[...],
                preferred_element_type=jnp.float32)
    h = h + jnp.dot(u_ref[...].astype(w1u_ref.dtype), w1u_ref[...],
                    preferred_element_type=jnp.float32)
    h = h + b1_ref[...]
    # EUP tanh: bf16 on v6e/v7x, f32 on v5e.
    h = jnp.tanh(h.astype(act_dtype))
    y = jnp.dot(h.astype(w2_ref.dtype), w2_ref[...],
                preferred_element_type=jnp.float32)
    # Store directly in the target dtype (no wrapper-side astype pass).
    o_ref[...] = (y + b2_ref[...]).astype(o_ref.dtype)


def _make_mlp_callable(params, *, tb_max=1024, compute_dtype=jnp.bfloat16,
                       out_dtype=None, act_dtype=None):
    """Returns callable(x, u) -> y backed by a single batch-tiled pallas_call.

    out_dtype=None keeps the input dtype; pass jnp.bfloat16 to halve the
    (lane-padded) output writeback when bf16 accuracy is acceptable.
    """
    w1x, w1u, b1, w2, b2 = [jnp.asarray(p, jnp.float32) for p in params]
    dim_x, hidden = w1x.shape
    dim_u = w1u.shape[0]
    dim_out = w2.shape[1]

    h_pad = _round_up(hidden, 128)          # lane-dense hidden
    n_pad = _round_up(dim_out, 128)         # lane-dense output store

    # --- one-time weight padding / casting (setup cost, not per call) -------
    w1x_p = jnp.pad(w1x, ((0, 0), (0, h_pad - hidden))).astype(compute_dtype)
    w1u_p = jnp.pad(w1u, ((0, 0), (0, h_pad - hidden))).astype(compute_dtype)
    b1_p = jnp.pad(b1.reshape(1, hidden),
                   ((0, 0), (0, h_pad - hidden))).astype(jnp.float32)
    w2_p = jnp.pad(w2, ((0, h_pad - hidden),
                        (0, n_pad - dim_out))).astype(compute_dtype)
    b2_p = jnp.pad(b2.reshape(1, dim_out),
                   ((0, 0), (0, n_pad - dim_out))).astype(jnp.float32)

    if act_dtype is None:
        act_dtype = _default_act_dtype()
    kernel = functools.partial(_node_mlp_kernel, act_dtype=act_dtype)

    def callable_fn(x, u):
        batch = x.shape[0]
        odt = x.dtype if out_dtype is None else out_dtype

        # Batch tile:
        #  * multiple of 16 rows (bf16 sublane packing) for batches > 16,
        #  * chosen so batches > 16 get >= 2 grid steps (both v7x TCs used),
        #  * capped at tb_max (large tiles amortize per-step overhead; even
        #    2048x128 tiles are only a couple of MiB double-buffered).
        if batch <= 16:
            tb = max(8, _round_up(batch, 8))
        else:
            tb = min(tb_max, max(16, _round_up(pl.cdiv(batch, 2), 16)))
        grid = (pl.cdiv(batch, tb),)

        out = pl.pallas_call(
            kernel,
            out_shape=jax.ShapeDtypeStruct((batch, n_pad), odt),
            grid_spec=pltpu.PrefetchScalarGridSpec(
                num_scalar_prefetch=0,
                grid=grid,
                in_specs=[
                    # batch-tiled activations, taken as-is from HBM
                    pl.BlockSpec((tb, dim_x), lambda i: (i, 0)),
                    pl.BlockSpec((tb, dim_u), lambda i: (i, 0)),
                    # grid-invariant weights/biases (VMEM resident)
                    pl.BlockSpec((dim_x, h_pad), lambda i: (0, 0)),
                    pl.BlockSpec((dim_u, h_pad), lambda i: (0, 0)),
                    pl.BlockSpec((1, h_pad), lambda i: (0, 0)),
                    pl.BlockSpec((h_pad, n_pad), lambda i: (0, 0)),
                    pl.BlockSpec((1, n_pad), lambda i: (0, 0)),
                ],
                out_specs=pl.BlockSpec((tb, n_pad), lambda i: (i, 0)),
            ),
            compiler_params=pltpu.CompilerParams(
                dimension_semantics=("parallel",)),
        )(x, u, w1x_p, w1u_p, b1_p, w2_p, b2_p)

        # Only lane padding is sliced off; rows were never padded (partial
        # last-block writes are masked by Pallas).
        return out[:, :dim_out]

    return jax.jit(callable_fn)


# ----------------------------------------------------------------------------
# Node: dict-in / dict-out wrapper (mirrors the PyTorch module's forward).
# ----------------------------------------------------------------------------
class Node:
    def __init__(self, callable, input_keys, output_keys, name=None):
        self.input_keys, self.output_keys = input_keys, output_keys
        self.callable, self.name = callable, name

    def forward(self, data):
        inputs = [data[k] for k in self.input_keys]
        output = self.callable(*inputs)
        if not isinstance(output, tuple):
            output = [output]
        return {k: v for k, v in zip(self.output_keys, output)}

    __call__ = forward

    # TODO(synk): freeze/unfreeze (requires_grad toggling) is torch training
    # bookkeeping with no Pallas/JAX-kernel equivalent; omitted.

    def __repr__(self):
        return f"{self.name}({', '.join(self.input_keys)}) -> {', '.join(self.output_keys)}"


# ----------------------------------------------------------------------------
# Pure-JAX reference (f32) for numerical sanity check.
# ----------------------------------------------------------------------------
def _reference(x, u, params):
    w1x, w1u, b1, w2, b2 = params
    h = jnp.tanh(x @ w1x + u @ w1u + b1)
    return h @ w2 + b2


if __name__ == "__main__":
    batch, dim_x, dim_u, hidden, dim_out = 8, 4, 3, 32, 4

    key = jax.random.PRNGKey(0)
    k_x, k_u, k1, k2, k3, k4, k5 = jax.random.split(key, 7)

    w1x = 0.1 * jax.random.normal(k1, (dim_x, hidden), jnp.float32)
    w1u = 0.1 * jax.random.normal(k2, (dim_u, hidden), jnp.float32)
    b1 = 0.1 * jax.random.normal(k3, (1, hidden), jnp.float32)
    w2 = 0.1 * jax.random.normal(k4, (hidden, dim_out), jnp.float32)
    b2 = 0.1 * jax.random.normal(k5, (1, dim_out), jnp.float32)
    params = (w1x, w1u, b1, w2, b2)

    # --- check 1: single-tile path (batch=8, grid=1), f32 output --------------
    x = jax.random.normal(k_x, (batch, dim_x), jnp.float32)
    u = jax.random.normal(k_u, (batch, dim_u), jnp.float32)
    data = {"x": x, "u": u}

    node = Node(_make_mlp_callable(params),
                input_keys=["x", "u"],
                output_keys=["x_next"],
                name="dynamics")

    out = node(data)
    y = jax.block_until_ready(out["x_next"])
    y_ref = _reference(x, u, params)
    assert y.shape == (batch, dim_out)
    # bf16 MXU operands -> loosened tolerance vs. the f32 reference
    assert jnp.allclose(y, y_ref, atol=2e-2, rtol=2e-2)

    # --- check 2: multi-tile path (batch=24 -> TB=16, grid=2, partial last
    # block), bf16 output store (halved writeback) -----------------------------
    x2 = jax.random.normal(jax.random.PRNGKey(1), (24, dim_x), jnp.float32)
    u2 = jax.random.normal(jax.random.PRNGKey(2), (24, dim_u), jnp.float32)
    node_tiled = Node(_make_mlp_callable(params, out_dtype=jnp.bfloat16),
                      input_keys=["x", "u"],
                      output_keys=["x_next"],
                      name="dynamics_tiled")
    y2 = jax.block_until_ready(node_tiled({"x": x2, "u": u2})["x_next"])
    y2_ref = _reference(x2, u2, params)
    assert y2.shape == (24, dim_out)
    assert y2.dtype == jnp.bfloat16
    assert jnp.allclose(y2.astype(jnp.float32), y2_ref, atol=2e-2, rtol=2e-2)

    print("KERNEL_OK")
</pallas_src>

<mosaic_0001>
module attributes {stable_mosaic.version = 11 : i64} {
  func.func @_node_mlp_kernel(%arg0: i32, %arg1: memref<8x4xf32, #tpu.memory_space<vmem>>, %arg2: memref<8x3xf32, #tpu.memory_space<vmem>>, %arg3: memref<4x128xbf16, #tpu.memory_space<vmem>>, %arg4: memref<3x128xbf16, #tpu.memory_space<vmem>>, %arg5: memref<1x128xf32, #tpu.memory_space<vmem>>, %arg6: memref<128x128xbf16, #tpu.memory_space<vmem>>, %arg7: memref<1x128xf32, #tpu.memory_space<vmem>>, %arg8: memref<8x128xf32, #tpu.memory_space<vmem>>) attributes {dimension_semantics = [#tpu.dimension_semantics<parallel>], iteration_bounds = array<i64: 1>, scalar_prefetch = 0 : i64, scratch_operands = 0 : i64, tpu.core_type = #tpu.core_type<tc>, window_params = [{transform_indices = @transform_0, window_bounds = array<i64: 8, 4>}, {transform_indices = @transform_1, window_bounds = array<i64: 8, 3>}, {pipeline_mode = #tpu.pipeline_mode<synchronous>, transform_indices = @transform_2, window_bounds = array<i64: 4, 128>}, {pipeline_mode = #tpu.pipeline_mode<synchronous>, transform_indices = @transform_3, window_bounds = array<i64: 3, 128>}, {pipeline_mode = #tpu.pipeline_mode<synchronous>, transform_indices = @transform_4, window_bounds = array<i64: 1, 128>}, {pipeline_mode = #tpu.pipeline_mode<synchronous>, transform_indices = @transform_5, window_bounds = array<i64: 128, 128>}, {pipeline_mode = #tpu.pipeline_mode<synchronous>, transform_indices = @transform_6, window_bounds = array<i64: 1, 128>}, {transform_indices = @transform_7, window_bounds = array<i64: 8, 128>}]} {
    %c0 = arith.constant 0 : index
    %c0_0 = arith.constant 0 : index
    %0 = vector.load %arg1[%c0, %c0_0] : memref<8x4xf32, #tpu.memory_space<vmem>>, vector<8x4xf32>
    %1 = arith.truncf %0 : vector<8x4xf32> to vector<8x4xbf16>
    %c0_1 = arith.constant 0 : index
    %c0_2 = arith.constant 0 : index
    %2 = vector.load %arg3[%c0_1, %c0_2] : memref<4x128xbf16, #tpu.memory_space<vmem>>, vector<4x128xbf16>
    %cst = arith.constant dense<0.000000e+00> : vector<8x128xf32>
    %3 = tpu.matmul %1, %2, %cst {dimension_numbers = #tpu.dot_dimension_numbers<[1], [0], [0], [1], [0, 0, 1, 1], [], []>} : vector<8x4xbf16>, vector<4x128xbf16>, vector<8x128xf32> -> vector<8x128xf32>
    %c0_3 = arith.constant 0 : index
    %c0_4 = arith.constant 0 : index
    %4 = vector.load %arg2[%c0_3, %c0_4] : memref<8x3xf32, #tpu.memory_space<vmem>>, vector<8x3xf32>
    %5 = arith.truncf %4 : vector<8x3xf32> to vector<8x3xbf16>
    %c0_5 = arith.constant 0 : index
    %c0_6 = arith.constant 0 : index
    %6 = vector.load %arg4[%c0_5, %c0_6] : memref<3x128xbf16, #tpu.memory_space<vmem>>, vector<3x128xbf16>
    %cst_7 = arith.constant dense<0.000000e+00> : vector<8x128xf32>
    %7 = tpu.matmul %5, %6, %cst_7 {dimension_numbers = #tpu.dot_dimension_numbers<[1], [0], [0], [1], [0, 0, 1, 1], [], []>} : vector<8x3xbf16>, vector<3x128xbf16>, vector<8x128xf32> -> vector<8x128xf32>
    %8 = arith.addf %3, %7 : vector<8x128xf32>
    %c0_8 = arith.constant 0 : index
    %c0_9 = arith.constant 0 : index
    %9 = vector.load %arg5[%c0_8, %c0_9] : memref<1x128xf32, #tpu.memory_space<vmem>>, vector<1x128xf32>
    %10 = vector.broadcast %9 : vector<1x128xf32> to vector<8x128xf32>
    %11 = arith.addf %8, %10 : vector<8x128xf32>
    %12 = arith.truncf %11 : vector<8x128xf32> to vector<8x128xbf16>
    %13 = math.tanh %12 : vector<8x128xbf16>
    %c0_10 = arith.constant 0 : index
    %c0_11 = arith.constant 0 : index
    %14 = vector.load %arg6[%c0_10, %c0_11] : memref<128x128xbf16, #tpu.memory_space<vmem>>, vector<128x128xbf16>
    %cst_12 = arith.constant dense<0.000000e+00> : vector<8x128xf32>
    %15 = tpu.matmul %13, %14, %cst_12 {dimension_numbers = #tpu.dot_dimension_numbers<[1], [0], [0], [1], [0, 0, 1, 1], [], []>} : vector<8x128xbf16>, vector<128x128xbf16>, vector<8x128xf32> -> vector<8x128xf32>
    %c0_13 = arith.constant 0 : index
    %c0_14 = arith.constant 0 : index
    %16 = vector.load %arg7[%c0_13, %c0_14] : memref<1x128xf32, #tpu.memory_space<vmem>>, vector<1x128xf32>
    %17 = vector.broadcast %16 : vector<1x128xf32> to vector<8x128xf32>
    %18 = arith.addf %15, %17 : vector<8x128xf32>
    %c0_15 = arith.constant 0 : index
    %c0_16 = arith.constant 0 : index
    %19 = vector.load %arg8[%c0_15, %c0_16] : memref<8x128xf32, #tpu.memory_space<vmem>>, vector<8x128xf32>
    tpu.vector_store %arg8[%c0_15, %c0_16], %18 {strides = array<i32>} : memref<8x128xf32, #tpu.memory_space<vmem>>, vector<8x128xf32>,
    return
  }
  func.func @transform_0(%arg0: i32) -> (i32, i32) {
    %c0_i32 = arith.constant 0 : i32
    %c0_i32_0 = arith.constant 0 : i32
    return %arg0, %c0_i32 : i32, i32
  }
  func.func @transform_1(%arg0: i32) -> (i32, i32) {
    %c0_i32 = arith.constant 0 : i32
    %c0_i32_0 = arith.constant 0 : i32
    return %arg0, %c0_i32 : i32, i32
  }
  func.func @transform_2(%arg0: i32) -> (i32, i32) {
    %c0_i32 = arith.constant 0 : i32
    %c0_i32_0 = arith.constant 0 : i32
    %c0_i32_1 = arith.constant 0 : i32
    return %c0_i32, %c0_i32_0 : i32, i32
  }
  func.func @transform_3(%arg0: i32) -> (i32, i32) {
    %c0_i32 = arith.constant 0 : i32
    %c0_i32_0 = arith.constant 0 : i32
    %c0_i32_1 = arith.constant 0 : i32
    return %c0_i32, %c0_i32_0 : i32, i32
  }
  func.func @transform_4(%arg0: i32) -> (i32, i32) {
    %c0_i32 = arith.constant 0 : i32
    %c0_i32_0 = arith.constant 0 : i32
    %c0_i32_1 = arith.constant 0 : i32
    return %c0_i32, %c0_i32_0 : i32, i32
  }
  func.func @transform_5(%arg0: i32) -> (i32, i32) {
    %c0_i32 = arith.constant 0 : i32
    %c0_i32_0 = arith.constant 0 : i32
    %c0_i32_1 = arith.constant 0 : i32
    return %c0_i32, %c0_i32_0 : i32, i32
  }
  func.func @transform_6(%arg0: i32) -> (i32, i32) {
    %c0_i32 = arith.constant 0 : i32
    %c0_i32_0 = arith.constant 0 : i32
    %c0_i32_1 = arith.constant 0 : i32
    return %c0_i32, %c0_i32_0 : i32, i32
  }
  func.func @transform_7(%arg0: i32) -> (i32, i32) {
    %c0_i32 = arith.constant 0 : i32
    %c0_i32_0 = arith.constant 0 : i32
    return %arg0, %c0_i32 : i32, i32
  }
}

</mosaic_0001>

<llo_original>
// kernel: callable_fn.1
$region0: #{callable_fn.1}
  #allocation0 [shape = 'u32[]', space=smem, size = 0x4, offset = 0x4, fixed_abs, tag = 'smem constant byte address 0x4 - core index']
  #allocation1 [shape = 'u32[144,128]{1,0:T(1,128)}', space=vmem, size = 0x12000, scoped, tag = 'internal scratch']
  %s0 = inlined_call_operand.vmem [shape: f32[8,4], index: 0, kind: input, shape index: {}]
  %s1 = inlined_call_operand.vmem [shape: f32[8,3], index: 1, kind: input, shape index: {}]
  %s2 = inlined_call_operand.vmem [shape: bf16[4,128], index: 2, kind: input, shape index: {}]
  %s3 = inlined_call_operand.vmem [shape: bf16[3,128], index: 3, kind: input, shape index: {}]
  %s4 = inlined_call_operand.vmem [shape: f32[1,128], index: 4, kind: input, shape index: {}]
  %s5 = inlined_call_operand.hbm [shape: bf16[128,128], index: 5, kind: input, shape index: {}]
  %s6 = inlined_call_operand.vmem [shape: f32[1,128], index: 6, kind: input, shape index: {}]
  %s7 = inlined_call_operand.vmem [shape: f32[8,128], index: 7, kind: output, shape index: {}]
  %s8 = sld [smem:[#allocation0]]
  $region42: #{callable_fn.1} parent=0
    _
  %s10 = ssub.s32 1, %s8
  %s11 = scalar_select 0, %s10, %s8
  $region1: #{callable_fn.1} parent=0
    #allocation2 [shape = 'u8[32768]{0}', space=vmem, size = 0x8000, scoped, tag = 'input window, operand 5, single buffered']
    #allocation3 [shape = 's32[1]{0}', space=sflag, size = 0x4, scoped, tag = 'scoped memory for callable_fn.1']
    %12 = vsyncpa [#allocation3], 0
    // Predicated region
    $region2: #{callable_fn.1} parent=1 // pred_check
      _
    $region3: #{callable_fn.1} parent=1 // pred_check_branch
      %14 = sbr.rel (0) target = $region5
    $region4: #{callable_fn.1} parent=1 // pred_region
      _
    $region5: #{callable_fn.1} parent=1 // pred_fallthru
      _
    // Predicated region
    $region6: #{callable_fn.1} parent=1 // pred_check
      _
    $region7: #{callable_fn.1} parent=1 // pred_check_branch
      %16 = sbr.rel (0) target = $region9
    $region8: #{callable_fn.1} parent=1 // pred_region
      _
    $region9: #{callable_fn.1} parent=1 // pred_fallthru
      _
    // Predicated region
    $region10: #{callable_fn.1} parent=1 // pred_check
      _
    $region11: #{callable_fn.1} parent=1 // pred_check_branch
      %18 = sbr.rel (0) target = $region13
    $region12: #{callable_fn.1} parent=1 // pred_region
      _
    $region13: #{callable_fn.1} parent=1 // pred_fallthru
      _
    // Predicated region
    $region14: #{callable_fn.1} parent=1 // pred_check
      _
    $region15: #{callable_fn.1} parent=1 // pred_check_branch
      %20 = sbr.rel (0) target = $region17
    $region16: #{callable_fn.1} parent=1 // pred_region
      _
    $region17: #{callable_fn.1} parent=1 // pred_fallthru
      _
    // Predicated region
    $region18: #{callable_fn.1} parent=1 // pred_check
      _
    $region19: #{callable_fn.1} parent=1 // pred_check_branch
      %22 = sbr.rel (0) target = $region21
    $region20: #{callable_fn.1} parent=1 // pred_region
      _
    $region21: #{callable_fn.1} parent=1 // pred_fallthru
      _
    // Predicated region
    $region22: #{callable_fn.1} parent=1 // pred_check
      _
    $region23: #{callable_fn.1} parent=1 // pred_check_branch
      %24 = sbr.rel (0) target = $region25
    $region24: #{callable_fn.1} parent=1 // pred_region
      %s26 = ssub.s32 1024, 1024
      %27 = vsyncadd [#allocation3], %s26
      %s28 = sshll.u32 [#allocation2], 4
      %s29 = int_to_ptr.vmem [resolvable:$true] %s28
      %34 = dma.hbm_to_vmem [thread:$0]  %s5, 1024, %s29, [#allocation3], 64, 64, 4
    $region25: #{callable_fn.1} parent=1 // pred_fallthru
      _
    // Predicated region
    $region26: #{callable_fn.1} parent=1 // pred_check
      _
    $region27: #{callable_fn.1} parent=1 // pred_check_branch
      %36 = sbr.rel (0) target = $region29
    $region28: #{callable_fn.1} parent=1 // pred_region
      _
    $region29: #{callable_fn.1} parent=1 // pred_fallthru
      _
    // Predicated region
    $region30: #{callable_fn.1} parent=1 // pred_check
      _
    $region31: #{callable_fn.1} parent=1 // pred_check_branch
      %38 = sbr.rel (0) target = $region33
    $region32: #{callable_fn.1} parent=1 // pred_region
      %39 = dma.done [#allocation3], 1024
    $region33: #{callable_fn.1} parent=1 // pred_fallthru
      _
    %v41 = vld [vmem:[%s0] sm:$0xff]
    %v42 = vpack.c.bf16 %v41, %v41
    %v43 = vld [vmem:[%s2] sm:$0x3]
    %v44 = vld [vmem:[%s1] sm:$0xff]
    %v45 = vpack.c.bf16 %v44, %v44
    %v46 = vld [vmem:[%s3] sm:$0x3]
    %vm47 = vcmask 23552
    %v49 = vsel %vm47, %v45, 0
    %vm51 = vcmask 1040384
    %vm52 = vcmask 1041408
    %v53 = vsel %vm51, 4294967295, 65535
    %v54 = vsel %vm52, %v53, 0
    %v56 = vand.u32 %v46, %v54
    %58 = vmatprep.subr.bf16.mxu0 0
    %59 = vmatpush1.bf16.msra.mxu0 %v56
    %60 = vmatprep.subr.bf16.mxu0 0
    %61 = vmatpush1.bf16.msra.mxu0 0
    %62 = vmatprep.subr.bf16.mxu0 0
    %63 = vmatpush1.bf16.msra.mxu0 0
    %64 = vmatprep.subr.bf16.mxu0 0
    %65 = vmatpush1.bf16.msra.mxu0 0
    %66 = vmatprep.subr.bf16.mxu0 0
    %67 = vmatpush1.bf16.msra.mxu0 0
    %68 = vmatprep.subr.bf16.mxu0 0
    %69 = vmatpush1.bf16.msra.mxu0 0
    %70 = vmatprep.subr.bf16.mxu0 0
    %71 = vmatpush1.bf16.msra.mxu0 0
    %72 = vmatprep.subr.bf16.mxu0 0
    %73 = vmatpush1.bf16.msra.mxu0 0
    %74 = vmatprep.subr.bf16.mxu0 0
    %75 = vmatpush1.bf16.msra.mxu0 0
    %76 = vmatprep.subr.bf16.mxu0 0
    %77 = vmatpush1.bf16.msra.mxu0 0
    %78 = vmatprep.subr.bf16.mxu0 0
    %79 = vmatpush1.bf16.msra.mxu0 0
    %80 = vmatprep.subr.bf16.mxu0 0
    %81 = vmatpush1.bf16.msra.mxu0 0
    %82 = vmatprep.subr.bf16.mxu0 0
    %83 = vmatpush1.bf16.msra.mxu0 0
    %84 = vmatprep.subr.bf16.mxu0 0
    %85 = vmatpush1.bf16.msra.mxu0 0
    %86 = vmatprep.subr.bf16.mxu0 0
    %87 = vmatpush1.bf16.msra.mxu0 0
    %88 = vmatprep.subr.bf16.mxu0 0
    %89 = vmatpush1.bf16.msra.mxu0 0
    %90 = vmatprep.mubr.bf16.mxu0 0
    %91 = vmatmul.mubr.bf16.gmra.mrb[0].mxu0 %v49
    %v92 = vpop.f32.mrb[0].mxu0
    %v93 = vadd.f32 0.0, %v92
    %v94 = vpop.f32.mrb[0].mxu0
    %v95 = vpop.f32.mrb[0].mxu0
    %v96 = vpop.f32.mrb[0].mxu0
    %97 = vdwg.mxu0
    %vm98 = vcmask 31744
    %v100 = vsel %vm98, %v42, 0
    %v103 = vsel %vm52, %v43, 0
    %105 = vmatprep.subr.bf16.mxu0 0
    %106 = vmatpush1.bf16.msra.mxu0 %v103
    %107 = vmatprep.subr.bf16.mxu0 0
    %108 = vmatpush1.bf16.msra.mxu0 0
    %109 = vmatprep.subr.bf16.mxu0 0
    %110 = vmatpush1.bf16.msra.mxu0 0
    %111 = vmatprep.subr.bf16.mxu0 0
    %112 = vmatpush1.bf16.msra.mxu0 0
    %113 = vmatprep.subr.bf16.mxu0 0
    %114 = vmatpush1.bf16.msra.mxu0 0
    %115 = vmatprep.subr.bf16.mxu0 0
    %116 = vmatpush1.bf16.msra.mxu0 0
    %117 = vmatprep.subr.bf16.mxu0 0
    %118 = vmatpush1.bf16.msra.mxu0 0
    %119 = vmatprep.subr.bf16.mxu0 0
    %120 = vmatpush1.bf16.msra.mxu0 0
    %121 = vmatprep.subr.bf16.mxu0 0
    %122 = vmatpush1.bf16.msra.mxu0 0
    %123 = vmatprep.subr.bf16.mxu0 0
    %124 = vmatpush1.bf16.msra.mxu0 0
    %125 = vmatprep.subr.bf16.mxu0 0
    %126 = vmatpush1.bf16.msra.mxu0 0
    %127 = vmatprep.subr.bf16.mxu0 0
    %128 = vmatpush1.bf16.msra.mxu0 0
    %129 = vmatprep.subr.bf16.mxu0 0
    %130 = vmatpush1.bf16.msra.mxu0 0
    %131 = vmatprep.subr.bf16.mxu0 0
    %132 = vmatpush1.bf16.msra.mxu0 0
    %133 = vmatprep.subr.bf16.mxu0 0
    %134 = vmatpush1.bf16.msra.mxu0 0
    %135 = vmatprep.subr.bf16.mxu0 0
    %136 = vmatpush1.bf16.msra.mxu0 0
    %137 = vmatprep.mubr.bf16.mxu0 0
    %138 = vmatmul.mubr.bf16.gmra.mrb[0].mxu0 %v100
    %v139 = vpop.f32.mrb[0].mxu0
    %v140 = vadd.f32 %v93, %v139
    %v141 = vpop.f32.mrb[0].mxu0
    %v142 = vpop.f32.mrb[0].mxu0
    %v143 = vpop.f32.mrb[0].mxu0
    %144 = vdwg.mxu0
    %v145 = vld [vmem:[%s4] sm:$0x1]
    %v147 = vlaneseq
    %v148 = vshrl.u32 %v147, 7
    %v149 = vsub.s32 0, %v148
    %v150 = vrot.slane %v145, %v149
    %v152 = vadd.f32 %v140, %v150
    %v153 = vpack.c.bf16 %v152, %v152
    %v154 = vtanh.bf16.pop %v153
    %v155 = vld [vmem:[#allocation2] sm:$0xf]
    %v156 = vld [vmem:[#allocation2 + $0x4] sm:$0xf]
    %v157 = vld [vmem:[#allocation2 + $0x8] sm:$0xf]
    %v158 = vld [vmem:[#allocation2 + $0xc] sm:$0xf]
    %v159 = vld [vmem:[#allocation2 + $0x10] sm:$0xf]
    %v160 = vld [vmem:[#allocation2 + $0x14] sm:$0xf]
    %v161 = vld [vmem:[#allocation2 + $0x18] sm:$0xf]
    %v162 = vld [vmem:[#allocation2 + $0x1c] sm:$0xf]
    %v163 = vld [vmem:[#allocation2 + $0x20] sm:$0xf]
    %v164 = vld [vmem:[#allocation2 + $0x24] sm:$0xf]
    %v165 = vld [vmem:[#allocation2 + $0x28] sm:$0xf]
    %v166 = vld [vmem:[#allocation2 + $0x2c] sm:$0xf]
    %v167 = vld [vmem:[#allocation2 + $0x30] sm:$0xf]
    %v168 = vld [vmem:[#allocation2 + $0x34] sm:$0xf]
    %v169 = vld [vmem:[#allocation2 + $0x38] sm:$0xf]
    %v170 = vld [vmem:[#allocation2 + $0x3c] sm:$0xf]
    %v171 = vld [vmem:[%s6] sm:$0x1]
    %v173 = vlaneseq
    %v174 = vshrl.u32 %v173, 7
    %v175 = vsub.s32 0, %v174
    %v176 = vrot.slane %v171, %v175
    %v194 = vunpack.c.l.b16 %v155
    %v195 = vunpack.c.l.b16 %v156
    %v196 = vunpack.c.l.b16 %v157
    %v197 = vunpack.c.l.b16 %v158
    %v198 = vunpack.c.l.b16 %v159
    %v199 = vunpack.c.l.b16 %v160
    %v200 = vunpack.c.l.b16 %v161
    %v201 = vunpack.c.l.b16 %v162
    %v202 = vunpack.c.l.b16 %v163
    %v203 = vunpack.c.l.b16 %v164
    %v204 = vunpack.c.l.b16 %v165
    %v205 = vunpack.c.l.b16 %v166
    %v206 = vunpack.c.l.b16 %v167
    %v207 = vunpack.c.l.b16 %v168
    %v208 = vunpack.c.l.b16 %v169
    %v209 = vunpack.c.l.b16 %v170
    %v210 = vpack.c.b16 %v195, %v194
    %v211 = vpack.c.b16 %v197, %v196
    %v212 = vpack.c.b16 %v199, %v198
    %v213 = vpack.c.b16 %v201, %v200
    %v214 = vpack.c.b16 %v203, %v202
    %v215 = vpack.c.b16 %v205, %v204
    %v216 = vpack.c.b16 %v207, %v206
    %v217 = vpack.c.b16 %v209, %v208
    %226 = vmatprep.subr.bf16.mxu0 0
    %227 = vmatpush1.bf16.msra.mxu0 %v210
    %228 = vmatprep.subr.bf16.mxu0 0
    %229 = vmatpush1.bf16.msra.mxu0 %v211
    %230 = vmatprep.subr.bf16.mxu0 0
    %231 = vmatpush1.bf16.msra.mxu0 %v212
    %232 = vmatprep.subr.bf16.mxu0 0
    %233 = vmatpush1.bf16.msra.mxu0 %v213
    %234 = vmatprep.subr.bf16.mxu0 0
    %235 = vmatpush1.bf16.msra.mxu0 %v214
    %236 = vmatprep.subr.bf16.mxu0 0
    %237 = vmatpush1.bf16.msra.mxu0 %v215
    %238 = vmatprep.subr.bf16.mxu0 0
    %239 = vmatpush1.bf16.msra.mxu0 %v216
    %240 = vmatprep.subr.bf16.mxu0 0
    %241 = vmatpush1.bf16.msra.mxu0 %v217
    %242 = vmatprep.subr.bf16.mxu0 0
    %243 = vmatpush1.bf16.msra.mxu0 0
    %244 = vmatprep.subr.bf16.mxu0 0
    %245 = vmatpush1.bf16.msra.mxu0 0
    %246 = vmatprep.subr.bf16.mxu0 0
    %247 = vmatpush1.bf16.msra.mxu0 0
    %248 = vmatprep.subr.bf16.mxu0 0
    %249 = vmatpush1.bf16.msra.mxu0 0
    %250 = vmatprep.subr.bf16.mxu0 0
    %251 = vmatpush1.bf16.msra.mxu0 0
    %252 = vmatprep.subr.bf16.mxu0 0
    %253 = vmatpush1.bf16.msra.mxu0 0
    %254 = vmatprep.subr.bf16.mxu0 0
    %255 = vmatpush1.bf16.msra.mxu0 0
    %256 = vmatprep.subr.bf16.mxu0 0
    %257 = vmatpush1.bf16.msra.mxu0 0
    %258 = vmatprep.mubr.bf16.mxu0 0
    %259 = vmatmul.mubr.bf16.gmra.mrb[0].mxu0 %v154
    %v260 = vpop.f32.mrb[0].mxu0
    %v261 = vadd.f32 %v176, %v260
    %v262 = vpop.f32.mrb[0].mxu0
    %v263 = vpop.f32.mrb[0].mxu0
    %v264 = vpop.f32.mrb[0].mxu0
    %265 = vdwg.mxu0
    %266 = vst [vmem:[%s7] sm:$0xff] %v261
    // Predicated region
    $region34: #{callable_fn.1} parent=1 // pred_check
      _
    $region35: #{callable_fn.1} parent=1 // pred_check_branch
      %268 = sbr.rel (0) target = $region37
    $region36: #{callable_fn.1} parent=1 // pred_region
      _
    $region37: #{callable_fn.1} parent=1 // pred_fallthru
      _
    // Predicated region
    $region38: #{callable_fn.1} parent=1 // pred_check
      _
    $region39: #{callable_fn.1} parent=1 // pred_check_branch
      %270 = sbr.rel (0) target = $region41
    $region40: #{callable_fn.1} parent=1 // pred_region
      _
    $region41: #{callable_fn.1} parent=1 // pred_fallthru
      _
    %271 = vsyncpa [#allocation3], 1

</llo_original>
